<compile_context>
chip_gen: v5e
topology: v5e:2x2
jax: 0.10.0
libtpu: 0.0.40
codegen_flags: <defaults>
</compile_context>

<pallas_src>
import jax
import jax.numpy as jnp
from jax import lax
from jax.experimental import pallas as pl
from jax.experimental.pallas import tpu as pltpu

GAMMA = 2.0               # module default
_NUM_CORE_SPLITS = 2      # leading "parallel" grid axis -> both TensorCores on v7x
_DEFAULT_CHUNK = 512      # rows per in-kernel step (bounds compiler temporaries)
_LANE = 128


def _cdiv(a, b):
    return -(-a // b)


def _round_up(x, m):
    return ((x + m - 1) // m) * m


def _vmem_capacity_bytes():
    """Per-core VMEM capacity; conservative 64 MiB (v7x) fallback."""
    try:
        info = pltpu.get_tpu_info()
        cap = getattr(info, "vmem_capacity_bytes", None)
        if cap:
            return int(cap)
    except Exception:
        pass
    return 64 << 20


def _choose_tiling(n, c, itemsize, chunk, input_budget_bytes):
    """Pick (tile_n, chunk, tiles_per_core).

    The double-buffered input working set (logits + lane-padded (N,1) targets)
    must fit input_budget_bytes; rows split ~evenly over the two core-parallel
    grid slots so neither core idles.
    """
    granule = max(8, 32 // max(itemsize, 1))          # 8 for f32, 16 for bf16
    c_pad = _round_up(c, _LANE)
    # Bytes of VMEM per row per buffer, assuming (8,128)-tiled block storage.
    per_row = 2 * (c_pad * itemsize + _LANE * 4)      # x2: double buffered
    cap_rows = max(chunk, (input_budget_bytes // per_row // chunk) * chunk)

    if n <= 16:
        return n, n, 1                                # single full block; dup slot masked
    if n <= _NUM_CORE_SPLITS * chunk:
        t = _round_up(_cdiv(n, _NUM_CORE_SPLITS), granule)
        return t, t, 1
    half = _cdiv(n, _NUM_CORE_SPLITS)
    tiles_per_core = _cdiv(half, cap_rows)
    tile_n = _round_up(_cdiv(n, _NUM_CORE_SPLITS * tiles_per_core), chunk)
    return tile_n, chunk, tiles_per_core


def _make_focal_loss_kernel(n_total, tile_n, chunk, tiles_per_core, needs_mask):
    n_chunks = tile_n // chunk
    assert n_chunks * chunk == tile_n

    def kernel(logits_ref, targets_ref, out_w_ref, out_ce_ref, acc_w_ref, acc_ce_ref):
        core = pl.program_id(0)          # "parallel" axis (megacore split)
        step = pl.program_id(1)          # "arbitrary" axis (row tiles per core)

        # Init the per-core carried accumulators at the start of this core's range.
        @pl.when(step == 0)
        def _():
            acc_w_ref[...] = jnp.zeros_like(acc_w_ref)
            acc_ce_ref[...] = jnp.zeros_like(acc_ce_ref)

        # Un-clamped global row offset of this tile (duplicate / padded slots land
        # beyond n_total and are masked below).
        tile_row0 = (core * tiles_per_core + step) * tile_n

        def chunk_body(j, carry):
            r0 = j * chunk
            if not isinstance(r0, int):
                r0 = pl.multiple_of(r0, chunk)

            # Upcast in-register (inputs may be bf16 in HBM).
            x = logits_ref[pl.ds(r0, chunk), :].astype(jnp.float32)   # (chunk, C)
            t = targets_ref[pl.ds(r0, chunk), :]                      # (chunk, 1) i32

            # Row-wise max / logsumexp; the only wide temporaries are x-m, exp.
            m = jnp.max(x, axis=-1, keepdims=True)                    # (chunk, 1)
            xm = x - m                                                # (chunk, C)
            lse = jnp.log(jnp.sum(jnp.exp(xm), axis=-1, keepdims=True))

            # Fused target-logit gather: select on the already-needed (x - m).
            col = lax.broadcasted_iota(jnp.int32, xm.shape, 1)
            x_t_m = jnp.sum(jnp.where(col == t, xm, 0.0), axis=-1, keepdims=True)

            ce = lse - x_t_m          # = -log p_t  (unweighted cross entropy)
            w = 1.0 + ce              # = 1 - log p_t
            fw = w * w                # gamma == 2 -> plain VALU square

            if needs_mask:
                row0 = tile_row0 + r0
                # Steady-state chunks (entirely inside N) take the cheap path;
                # only the chunk(s) crossing N pay for the row-validity select.
                # Padded rows may hold garbage/NaN, but every reduction above is
                # per-row, so the select fully contains them.
                @pl.when(row0 + chunk <= n_total)
                def _():
                    acc_w_ref[...] += fw
                    acc_ce_ref[...] += ce

                @pl.when(row0 + chunk > n_total)
                def _():
                    rows = row0 + lax.broadcasted_iota(jnp.int32, (chunk, 1), 0)
                    valid = rows < n_total
                    acc_w_ref[...] += jnp.where(valid, fw, 0.0)
                    acc_ce_ref[...] += jnp.where(valid, ce, 0.0)
            else:
                acc_w_ref[...] += fw
                acc_ce_ref[...] += ce
            return carry

        if n_chunks == 1:
            chunk_body(0, 0)
        else:
            lax.fori_loop(0, n_chunks, chunk_body, 0)

        # Epilogue: one cross-sublane reduce + one (lane-dense) store per core.
        @pl.when(step == tiles_per_core - 1)
        def _():
            out_w_ref[...] = jnp.broadcast_to(
                jnp.sum(acc_w_ref[...], keepdims=True), (1, _LANE))
            out_ce_ref[...] = jnp.broadcast_to(
                jnp.sum(acc_ce_ref[...], keepdims=True), (1, _LANE))

    return kernel


def focal_loss(inputs, targets, gamma=2.0, reduction="mean",
               tile_n=None, chunk=_DEFAULT_CHUNK):
    """Pallas FocalLoss forward. inputs: (N, C) float (f32/bf16), targets: (N,) int."""
    assert gamma == GAMMA, "TODO(synk): only the module-default gamma=2 is implemented"
    assert reduction == "mean", "TODO(synk): reduction='sum'/'none' not implemented"

    N, C = inputs.shape
    itemsize = jnp.dtype(inputs.dtype).itemsize

    # Generation-aware VMEM budget: scoped limit at ~3/4 of per-core capacity
    # (v5e/v6e 128 MiB -> 96 MiB, v7x 64 MiB -> 48 MiB); inputs get what is left
    # after a fixed reserve for accumulators / chunk-sized compiler temporaries.
    capacity = _vmem_capacity_bytes()
    vmem_limit = max(32 << 20, min(int(capacity * 3 // 4), 96 << 20))
    fixed_reserve = 10 * chunk * _LANE * 4 + (2 << 20)
    input_budget = max(1 << 20, vmem_limit - fixed_reserve)

    if tile_n is None:
        tile_n, chunk, tiles_per_core = _choose_tiling(N, C, itemsize, chunk, input_budget)
    else:
        tile_n = min(int(tile_n), N)
        assert tile_n == N or tile_n % 8 == 0, "tile_n must be a multiple of 8 when tiling N"
        chunk = min(int(chunk), tile_n)
        if tile_n % chunk != 0:
            chunk = tile_n            # fall back to a single chunk per tile
        tiles_per_core = max(1, _cdiv(_cdiv(N, tile_n), _NUM_CORE_SPLITS))

    num_data_tiles = _cdiv(N, tile_n)
    last_tile = num_data_tiles - 1
    needs_mask = (_NUM_CORE_SPLITS * tiles_per_core * tile_n) != N

    # TODO(synk): the (N,1) targets layout is lane-padded to 128 in HBM/VMEM; a
    # lane-dense packing would cut that traffic but needs an in-kernel relayout.
    t2 = targets.astype(jnp.int32).reshape(N, 1)

    def in_map(c, i):
        # Clamp: padded grid slots beyond the data re-read the last real tile and
        # are fully masked inside the kernel.
        return (jnp.minimum(c * tiles_per_core + i, last_tile), 0)

    def out_map(c, i):
        return (0, c)

    kernel = _make_focal_loss_kernel(N, tile_n, chunk, tiles_per_core, needs_mask)

    part_w, part_ce = pl.pallas_call(
        kernel,
        out_shape=(
            jax.ShapeDtypeStruct((1, _NUM_CORE_SPLITS * _LANE), jnp.float32),
            jax.ShapeDtypeStruct((1, _NUM_CORE_SPLITS * _LANE), jnp.float32),
        ),
        grid=(_NUM_CORE_SPLITS, tiles_per_core),
        in_specs=[
            pl.BlockSpec((tile_n, C), in_map),   # logits tile
            pl.BlockSpec((tile_n, 1), in_map),   # targets tile
        ],
        out_specs=(
            pl.BlockSpec((1, _LANE), out_map),   # per-core sum(focal_weight)
            pl.BlockSpec((1, _LANE), out_map),   # per-core sum(ce)
        ),
        scratch_shapes=[
            pltpu.VMEM((chunk, 1), jnp.float32),  # per-row running focal_weight partials
            pltpu.VMEM((chunk, 1), jnp.float32),  # per-row running ce partials
        ],
        compiler_params=pltpu.CompilerParams(
            dimension_semantics=("parallel", "arbitrary"),
            vmem_limit_bytes=int(vmem_limit),
        ),
    )(inputs, t2)

    # Every lane of a core's output block holds the same partial; pick lane 0.
    pw = part_w.reshape(_NUM_CORE_SPLITS, _LANE)[:, 0]
    pce = part_ce.reshape(_NUM_CORE_SPLITS, _LANE)[:, 0]
    sum_w = jnp.sum(pw)
    sum_ce = jnp.sum(pce)
    # Exact factorization of mean((N,1)*(N,) outer product) = sum_w * sum_ce / N^2.
    return (sum_w * sum_ce) / jnp.float32(float(N) * float(N))


def _focal_loss_ref(inputs, targets, gamma=2.0):
    # Pure-JAX reference mirroring the PyTorch code (incl. (N,1)*(N,) -> (N,N) broadcast).
    logp = jax.nn.log_softmax(inputs.astype(jnp.float32), axis=-1)
    class_probs = jnp.take_along_axis(logp, targets.reshape(-1, 1), axis=1)   # (N, 1)
    focal_weight = (1.0 - class_probs) ** gamma                               # (N, 1)
    ce = -class_probs[:, 0]                                                   # (N,)
    loss = focal_weight * ce[None, :]                                         # (N, N)
    return loss.mean()


if __name__ == "__main__":
    key = jax.random.PRNGKey(0)
    k1, k2, k3, k4 = jax.random.split(key, 4)

    # Case 1: tiny single-tile path (N=8, C=32), f32, auto tiling.
    N1, C1 = 8, 32
    x1 = jax.random.normal(k1, (N1, C1), dtype=jnp.float32)
    t1 = jax.random.randint(k2, (N1,), 0, C1, dtype=jnp.int32)
    out1 = jax.block_until_ready(focal_loss(x1, t1))
    ref1 = _focal_loss_ref(x1, t1)
    assert jnp.allclose(out1, ref1, rtol=2e-5, atol=1e-6), (out1, ref1)

    # Case 2: auto tiling — two-core split with a masked partial second half (N=300).
    N2, C2 = 300, 32
    x2 = jax.random.normal(k3, (N2, C2), dtype=jnp.float32)
    t2 = jax.random.randint(k4, (N2,), 0, C2, dtype=jnp.int32)
    out2 = jax.block_until_ready(focal_loss(x2, t2))
    ref2 = _focal_loss_ref(x2, t2)
    assert jnp.allclose(out2, ref2, rtol=2e-5, atol=1e-6), (out2, ref2)

    # Case 3: explicit small tiles -> multi-tile grid, in-kernel chunk loop, and a
    # clamped fully-masked duplicate slot (3 data tiles over a (2,2) grid).
    out3 = jax.block_until_ready(focal_loss(x2, t2, tile_n=128, chunk=64))
    assert jnp.allclose(out3, ref2, rtol=2e-5, atol=1e-6), (out3, ref2)

    # Case 4: bf16 logits stay bf16 in HBM; the f32 upcast happens in-register.
    x4 = x2.astype(jnp.bfloat16)
    out4 = jax.block_until_ready(focal_loss(x4, t2, tile_n=128, chunk=64))
    ref4 = _focal_loss_ref(x4.astype(jnp.float32), t2)
    assert jnp.allclose(out4, ref4, rtol=2e-5, atol=1e-6), (out4, ref4)

    print("KERNEL_OK")
</pallas_src>

<mosaic_0001>
module attributes {stable_mosaic.version = 11 : i64} {
  func.func @kernel(%arg0: i32, %arg1: i32, %arg2: memref<8x32xf32, #tpu.memory_space<vmem>>, %arg3: memref<8x1xi32, #tpu.memory_space<vmem>>, %arg4: memref<1x128xf32, #tpu.memory_space<vmem>>, %arg5: memref<1x128xf32, #tpu.memory_space<vmem>>, %arg6: memref<8x1xf32, #tpu.memory_space<vmem>>, %arg7: memref<8x1xf32, #tpu.memory_space<vmem>>) attributes {dimension_semantics = [#tpu.dimension_semantics<parallel>, #tpu.dimension_semantics<arbitrary>], iteration_bounds = array<i64: 2, 1>, scalar_prefetch = 0 : i64, scratch_operands = 2 : i64, tpu.core_type = #tpu.core_type<tc>, window_params = [{transform_indices = @transform_0, window_bounds = array<i64: 8, 32>}, {transform_indices = @transform_1, window_bounds = array<i64: 8, 1>}, {transform_indices = @transform_2, window_bounds = array<i64: 1, 128>}, {transform_indices = @transform_3, window_bounds = array<i64: 1, 128>}]} {
    %c0_i32 = arith.constant 0 : i32
    %0 = arith.cmpi eq, %arg1, %c0_i32 : i32
    %1 = arith.extui %0 : i1 to i32
    %c0_i32_0 = arith.constant 0 : i32
    %2 = arith.cmpi ne, %1, %c0_i32_0 : i32
    scf.if %2 {
      %cst_17 = arith.constant 0.000000e+00 : f32
      %39 = vector.broadcast %cst_17 : f32 to vector<8x1xf32>
      %c0_18 = arith.constant 0 : index
      %c0_19 = arith.constant 0 : index
      %40 = vector.load %arg6[%c0_18, %c0_19] : memref<8x1xf32, #tpu.memory_space<vmem>>, vector<8x1xf32>
      tpu.vector_store %arg6[%c0_18, %c0_19], %39 {strides = array<i32>} : memref<8x1xf32, #tpu.memory_space<vmem>>, vector<8x1xf32>,
      %cst_20 = arith.constant 0.000000e+00 : f32
      %41 = vector.broadcast %cst_20 : f32 to vector<8x1xf32>
      %c0_21 = arith.constant 0 : index
      %c0_22 = arith.constant 0 : index
      %42 = vector.load %arg7[%c0_21, %c0_22] : memref<8x1xf32, #tpu.memory_space<vmem>>, vector<8x1xf32>
      tpu.vector_store %arg7[%c0_21, %c0_22], %41 {strides = array<i32>} : memref<8x1xf32, #tpu.memory_space<vmem>>, vector<8x1xf32>,
    } else {
    }
    %c1_i32 = arith.constant 1 : i32
    %3 = arith.muli %arg0, %c1_i32 : i32
    %4 = arith.addi %3, %arg1 : i32
    %c8_i32 = arith.constant 8 : i32
    %5 = arith.muli %4, %c8_i32 : i32
    %c0 = arith.constant 0 : index
    %c0_1 = arith.constant 0 : index
    %6 = vector.load %arg2[%c0, %c0_1] : memref<8x32xf32, #tpu.memory_space<vmem>>, vector<8x32xf32>
    %c0_2 = arith.constant 0 : index
    %c0_3 = arith.constant 0 : index
    %7 = vector.load %arg3[%c0_2, %c0_3] : memref<8x1xi32, #tpu.memory_space<vmem>>, vector<8x1xi32>
    %cst = arith.constant dense<0xFF800000> : vector<8xf32>
    %8 = vector.multi_reduction <maximumf>, %6, %cst [1] : vector<8x32xf32> to vector<8xf32>
    %9 = vector.shape_cast %8 : vector<8xf32> to vector<8x1xf32>
    %10 = vector.broadcast %9 : vector<8x1xf32> to vector<8x32xf32>
    %11 = arith.subf %6, %10 : vector<8x32xf32>
    %12 = math.exp %11 : vector<8x32xf32>
    %cst_4 = arith.constant dense<0.000000e+00> : vector<8xf32>
    %13 = vector.multi_reduction <add>, %12, %cst_4 [1] : vector<8x32xf32> to vector<8xf32>
    %14 = vector.shape_cast %13 : vector<8xf32> to vector<8x1xf32>
    %15 = math.log %14 : vector<8x1xf32>
    %16 = tpu.iota {dimensions = array<i32: 1>} : vector<8x32xi32>
    %17 = vector.broadcast %7 : vector<8x1xi32> to vector<8x32xi32>
    %18 = arith.cmpi eq, %16, %17 : vector<8x32xi32>
    %cst_5 = arith.constant 0.000000e+00 : f32
    %19 = vector.broadcast %cst_5 : f32 to vector<8x32xf32>
    %20 = arith.select %18, %11, %19 : vector<8x32xi1>, vector<8x32xf32>
    %cst_6 = arith.constant dense<0.000000e+00> : vector<8xf32>
    %21 = vector.multi_reduction <add>, %20, %cst_6 [1] : vector<8x32xf32> to vector<8xf32>
    %22 = vector.shape_cast %21 : vector<8xf32> to vector<8x1xf32>
    %23 = arith.subf %15, %22 : vector<8x1xf32>
    %cst_7 = arith.constant 1.000000e+00 : f32
    %24 = vector.broadcast %cst_7 : f32 to vector<8x1xf32>
    %25 = arith.addf %24, %23 : vector<8x1xf32>
    %26 = arith.mulf %25, %25 : vector<8x1xf32>
    %c0_i32_8 = arith.constant 0 : i32
    %27 = arith.addi %5, %c0_i32_8 : i32
    %c8_i32_9 = arith.constant 8 : i32
    %28 = arith.addi %27, %c8_i32_9 : i32
    %c8_i32_10 = arith.constant 8 : i32
    %29 = arith.cmpi sle, %28, %c8_i32_10 : i32
    %30 = arith.extui %29 : i1 to i32
    %c0_i32_11 = arith.constant 0 : i32
    %31 = arith.cmpi ne, %30, %c0_i32_11 : i32
    scf.if %31 {
      %c0_17 = arith.constant 0 : index
      %c0_18 = arith.constant 0 : index
      %39 = vector.load %arg6[%c0_17, %c0_18] : memref<8x1xf32, #tpu.memory_space<vmem>>, vector<8x1xf32>
      %40 = arith.addf %39, %26 : vector<8x1xf32>
      %c0_19 = arith.constant 0 : index
      %c0_20 = arith.constant 0 : index
      %41 = vector.load %arg6[%c0_19, %c0_20] : memref<8x1xf32, #tpu.memory_space<vmem>>, vector<8x1xf32>
      tpu.vector_store %arg6[%c0_19, %c0_20], %40 {strides = array<i32>} : memref<8x1xf32, #tpu.memory_space<vmem>>, vector<8x1xf32>,
      %c0_21 = arith.constant 0 : index
      %c0_22 = arith.constant 0 : index
      %42 = vector.load %arg7[%c0_21, %c0_22] : memref<8x1xf32, #tpu.memory_space<vmem>>, vector<8x1xf32>
      %43 = arith.addf %42, %23 : vector<8x1xf32>
      %c0_23 = arith.constant 0 : index
      %c0_24 = arith.constant 0 : index
      %44 = vector.load %arg7[%c0_23, %c0_24] : memref<8x1xf32, #tpu.memory_space<vmem>>, vector<8x1xf32>
      tpu.vector_store %arg7[%c0_23, %c0_24], %43 {strides = array<i32>} : memref<8x1xf32, #tpu.memory_space<vmem>>, vector<8x1xf32>,
    } else {
    }
    %c8_i32_12 = arith.constant 8 : i32
    %32 = arith.addi %27, %c8_i32_12 : i32
    %c8_i32_13 = arith.constant 8 : i32
    %33 = arith.cmpi sgt, %32, %c8_i32_13 : i32
    %34 = arith.extui %33 : i1 to i32
    %c0_i32_14 = arith.constant 0 : i32
    %35 = arith.cmpi ne, %34, %c0_i32_14 : i32
    scf.if %35 {
      %39 = tpu.iota {dimensions = array<i32: 0>} : vector<8x1xi32>
      %40 = vector.broadcast %27 : i32 to vector<8x1xi32>
      %41 = arith.addi %40, %39 : vector<8x1xi32>
      %c8_i32_17 = arith.constant 8 : i32
      %42 = vector.broadcast %c8_i32_17 : i32 to vector<8x1xi32>
      %43 = arith.cmpi slt, %41, %42 : vector<8x1xi32>
      %c0_18 = arith.constant 0 : index
      %c0_19 = arith.constant 0 : index
      %44 = vector.load %arg6[%c0_18, %c0_19] : memref<8x1xf32, #tpu.memory_space<vmem>>, vector<8x1xf32>
      %cst_20 = arith.constant 0.000000e+00 : f32
      %45 = vector.broadcast %cst_20 : f32 to vector<8x1xf32>
      %46 = arith.select %43, %26, %45 : vector<8x1xi1>, vector<8x1xf32>
      %47 = arith.addf %44, %46 : vector<8x1xf32>
      %c0_21 = arith.constant 0 : index
      %c0_22 = arith.constant 0 : index
      %48 = vector.load %arg6[%c0_21, %c0_22] : memref<8x1xf32, #tpu.memory_space<vmem>>, vector<8x1xf32>
      tpu.vector_store %arg6[%c0_21, %c0_22], %47 {strides = array<i32>} : memref<8x1xf32, #tpu.memory_space<vmem>>, vector<8x1xf32>,
      %c0_23 = arith.constant 0 : index
      %c0_24 = arith.constant 0 : index
      %49 = vector.load %arg7[%c0_23, %c0_24] : memref<8x1xf32, #tpu.memory_space<vmem>>, vector<8x1xf32>
      %cst_25 = arith.constant 0.000000e+00 : f32
      %50 = vector.broadcast %cst_25 : f32 to vector<8x1xf32>
      %51 = arith.select %43, %23, %50 : vector<8x1xi1>, vector<8x1xf32>
      %52 = arith.addf %49, %51 : vector<8x1xf32>
      %c0_26 = arith.constant 0 : index
      %c0_27 = arith.constant 0 : index
      %53 = vector.load %arg7[%c0_26, %c0_27] : memref<8x1xf32, #tpu.memory_space<vmem>>, vector<8x1xf32>
      tpu.vector_store %arg7[%c0_26, %c0_27], %52 {strides = array<i32>} : memref<8x1xf32, #tpu.memory_space<vmem>>, vector<8x1xf32>,
    } else {
    }
    %c0_i32_15 = arith.constant 0 : i32
    %36 = arith.cmpi eq, %arg1, %c0_i32_15 : i32
    %37 = arith.extui %36 : i1 to i32
    %c0_i32_16 = arith.constant 0 : i32
    %38 = arith.cmpi ne, %37, %c0_i32_16 : i32
    scf.if %38 {
      %c0_17 = arith.constant 0 : index
      %c0_18 = arith.constant 0 : index
      %39 = vector.load %arg6[%c0_17, %c0_18] : memref<8x1xf32, #tpu.memory_space<vmem>>, vector<8x1xf32>
      %40 = vector.shape_cast %39 : vector<8x1xf32> to vector<1x8x1xf32>
      %cst_19 = arith.constant dense<0.000000e+00> : vector<1xf32>
      %41 = vector.multi_reduction <add>, %40, %cst_19 [1, 2] : vector<1x8x1xf32> to vector<1xf32>
      %42 = vector.shape_cast %41 : vector<1xf32> to vector<1x1x1xf32>
      %43 = vector.extract %42[0, 0, 0] : f32 from vector<1x1x1xf32>
      %44 = vector.broadcast %43 : f32 to vector<1x1xf32>
      %45 = vector.shape_cast %44 : vector<1x1xf32> to vector<1x1xf32>
      %46 = vector.broadcast %45 : vector<1x1xf32> to vector<1x128xf32>
      %c0_20 = arith.constant 0 : index
      %c0_21 = arith.constant 0 : index
      %47 = vector.load %arg4[%c0_20, %c0_21] : memref<1x128xf32, #tpu.memory_space<vmem>>, vector<1x128xf32>
      tpu.vector_store %arg4[%c0_20, %c0_21], %46 {strides = array<i32>} : memref<1x128xf32, #tpu.memory_space<vmem>>, vector<1x128xf32>,
      %c0_22 = arith.constant 0 : index
      %c0_23 = arith.constant 0 : index
      %48 = vector.load %arg7[%c0_22, %c0_23] : memref<8x1xf32, #tpu.memory_space<vmem>>, vector<8x1xf32>
      %49 = vector.shape_cast %48 : vector<8x1xf32> to vector<1x8x1xf32>
      %cst_24 = arith.constant dense<0.000000e+00> : vector<1xf32>
      %50 = vector.multi_reduction <add>, %49, %cst_24 [1, 2] : vector<1x8x1xf32> to vector<1xf32>
      %51 = vector.shape_cast %50 : vector<1xf32> to vector<1x1x1xf32>
      %52 = vector.extract %51[0, 0, 0] : f32 from vector<1x1x1xf32>
      %53 = vector.broadcast %52 : f32 to vector<1x1xf32>
      %54 = vector.shape_cast %53 : vector<1x1xf32> to vector<1x1xf32>
      %55 = vector.broadcast %54 : vector<1x1xf32> to vector<1x128xf32>
      %c0_25 = arith.constant 0 : index
      %c0_26 = arith.constant 0 : index
      %56 = vector.load %arg5[%c0_25, %c0_26] : memref<1x128xf32, #tpu.memory_space<vmem>>, vector<1x128xf32>
      tpu.vector_store %arg5[%c0_25, %c0_26], %55 {strides = array<i32>} : memref<1x128xf32, #tpu.memory_space<vmem>>, vector<1x128xf32>,
    } else {
    }
    return
  }
  func.func @transform_0(%arg0: i32, %arg1: i32) -> (i32, i32) {
    %c1_i32 = arith.constant 1 : i32
    %0 = arith.muli %arg0, %c1_i32 : i32
    %1 = arith.addi %0, %arg1 : i32
    %c0_i32 = arith.constant 0 : i32
    %2 = arith.minsi %1, %c0_i32 : i32
    %c0_i32_0 = arith.constant 0 : i32
    %c0_i32_1 = arith.constant 0 : i32
    return %2, %c0_i32_0 : i32, i32
  }
  func.func @transform_1(%arg0: i32, %arg1: i32) -> (i32, i32) {
    %c1_i32 = arith.constant 1 : i32
    %0 = arith.muli %arg0, %c1_i32 : i32
    %1 = arith.addi %0, %arg1 : i32
    %c0_i32 = arith.constant 0 : i32
    %2 = arith.minsi %1, %c0_i32 : i32
    %c0_i32_0 = arith.constant 0 : i32
    %c0_i32_1 = arith.constant 0 : i32
    return %2, %c0_i32_0 : i32, i32
  }
  func.func @transform_2(%arg0: i32, %arg1: i32) -> (i32, i32) {
    %c0_i32 = arith.constant 0 : i32
    %c0_i32_0 = arith.constant 0 : i32
    return %c0_i32, %arg0 : i32, i32
  }
  func.func @transform_3(%arg0: i32, %arg1: i32) -> (i32, i32) {
    %c0_i32 = arith.constant 0 : i32
    %c0_i32_0 = arith.constant 0 : i32
    return %c0_i32, %arg0 : i32, i32
  }
}

</mosaic_0001>

<llo_original>
// kernel: tpu_custom_call.1
$region0: #{tpu_custom_call.1}
  #allocation0 [shape = 'u32[]', space=smem, size = 0x4, offset = 0x4, fixed_abs, tag = 'smem constant byte address 0x4 - core index']
  #allocation1 [shape = 'u32[72,128]{1,0:T(1,128)}', space=vmem, size = 0x9000, scoped, tag = 'internal scratch']
  #allocation2 [shape = 'f32[8,1]{1,0:T(8,128)}', space=vmem, size = 0x1000, scoped, tag = 'scratch operand']
  #allocation3 [shape = 'f32[8,1]{1,0:T(8,128)}', space=vmem, size = 0x1000, scoped, tag = 'scratch operand']
  %s0 = inlined_call_operand.vmem [shape: f32[8,32], index: 0, kind: input, shape index: {}]
  %s1 = inlined_call_operand.vmem [shape: s32[8,1], index: 1, kind: input, shape index: {}]
  %s2 = inlined_call_operand.hbm [shape: f32[1,256], index: 2, kind: output, shape index: {0}]
  %s3 = inlined_call_operand.hbm [shape: f32[1,256], index: 3, kind: output, shape index: {1}]
  %4 = xla_tuple %s2, %s3
  %s5 = sld [smem:[#allocation0]]
  $region65: #{tpu_custom_call.1} parent=0
    _
  %s7 = ssub.s32 1, %s5
  %s8 = scalar_select 0, %s7, %s5
  $region1: #{tpu_custom_call.1} parent=0
    #allocation4 [shape = 'u8[1024]{0}', space=vmem, size = 0x400, scoped, tag = 'output window, operand 0']
    #allocation5 [shape = 's32[2]{0}', space=sflag, size = 0x8, scoped, tag = 'scoped memory for tpu_custom_call.1']
    #allocation6 [shape = 'u8[1024]{0}', space=vmem, size = 0x400, scoped, tag = 'output window, operand 1']
    #allocation7 [shape = 's32[2]{0}', space=sflag, size = 0x8, scoped, tag = 'scoped memory for tpu_custom_call.1']
    %9 = vsyncpa [#allocation5], 0
    %s10 = scalar_lea.sflag [#allocation5], 1
    %11 = vsyncpa %s10, 0
    %12 = vsyncpa [#allocation7], 0
    %s13 = scalar_lea.sflag [#allocation7], 1
    %14 = vsyncpa %s13, 0
    loop: start=0, step=1, limit=4
    $region2: #{tpu_custom_call.1} parent=1 // loop_pre_header
      _
    $region3: #{tpu_custom_call.1} parent=1 // loop_header
      %s16 = sphi 0, %s20
      %p17 = scmp.ge.s32.totalorder %s16, 4
      %s23 = sphi 0, %s35
      %s24 = sphi 0, %s31
      %s25 = sphi 0, %s23
      %s26 = sphi 0, %s24
      %s27 = sphi 0, %s25
      %s28 = sphi 0, %s26
      %s44 = sphi 0, %s46
      %s47 = sphi 0, %s44
      %s48 = sphi 0, %s47
      %s64 = sphi 0, %s48
      %s76 = sphi 0, %s78
      %s79 = sphi 0, %s76
      %s80 = sphi 0, %s79
      %s96 = sphi 0, %s80
      %s102 = sphi 0, %s104
      %s105 = sphi 0, %s102
      %s106 = sphi 0, %s105
      %s122 = sphi 0, %s106
      %s128 = sphi 0, %s130
      %s131 = sphi 0, %s128
      %s132 = sphi 0, %s131
      %s148 = sphi 0, %s132
    $region4: #{tpu_custom_call.1} parent=1 // loop_header_branch
      %19 = sbr.rel (%p17) target = $region8
    $region5: #{tpu_custom_call.1} parent=1 // loop_body
      %s21 = ssub.s32 %s16, 1
      %s22 = ssub.s32 %s16, 2
      %s29 = sadd.s32 1, %s24
      %p30 = scmp.ge.s32.totalorder %s29, 1
      %s31 = scalar_select %p30, 0, %s29
      %s32 = sadd.s32 1, %s23
      %s33 = scalar_select %p30, %s32, %s23
      %p34 = scmp.ge.s32.totalorder %s33, 2
      %s35 = scalar_select %p34, 0, %s33
      %s36 = sadd.s32 %s23, %s24
      %p37 = scmp.lt.s32.totalorder %s36, 0
      %s38 = scalar_select %p37, %s36, 0
      %s39 = sadd.s32 %s35, %s31
      %p40 = scmp.lt.s32.totalorder %s39, 0
      %s41 = scalar_select %p40, %s39, 0
      %s42 = ssub.s32 %s38, %s41
      %p43 = scmp.eq.s32.totalorder %s42, 0
      %s45 = sadd.s32 %s44, 1
      %s46 = scalar_select %p43, %s44, %s45
      %p49 = pneg %p43
      %p50 = scmp.eq.s32.totalorder %s16, 1
      %p51 = por %p49, %p50
      %p52 = scmp.ne.s32.totalorder %s44, %s47
      %p53 = scmp.eq.s32.totalorder %s16, 0
      %p54 = por %p52, %p53
      %p55 = scmp.ne.s32.totalorder %s44, %s47
      %p56 = scmp.eq.s32.totalorder %s21, 1
      %p57 = por %p55, %p56
      %p58 = scmp.ne.s32.totalorder %s47, %s48
      %p59 = scmp.eq.s32.totalorder %s21, 0
      %p60 = por %p58, %p59
      %p61 = scmp.ne.s32.totalorder %s47, %s48
      %p62 = scmp.eq.s32.totalorder %s22, 1
      %p63 = por %p61, %p62
      %p65 = scmp.ne.s32.totalorder %s48, %s64
      %p66 = scmp.eq.s32.totalorder %s22, 0
      %p67 = por %p65, %p66
      %s68 = sadd.s32 %s23, %s24
      %p69 = scmp.lt.s32.totalorder %s68, 0
      %s70 = scalar_select %p69, %s68, 0
      %s71 = sadd.s32 %s35, %s31
      %p72 = scmp.lt.s32.totalorder %s71, 0
      %s73 = scalar_select %p72, %s71, 0
      %s74 = ssub.s32 %s70, %s73
      %p75 = scmp.eq.s32.totalorder %s74, 0
      %s77 = sadd.s32 %s76, 1
      %s78 = scalar_select %p75, %s76, %s77
      %p81 = pneg %p75
      %p82 = scmp.eq.s32.totalorder %s16, 1
      %p83 = por %p81, %p82
      %p84 = scmp.ne.s32.totalorder %s76, %s79
      %p85 = scmp.eq.s32.totalorder %s16, 0
      %p86 = por %p84, %p85
      %p87 = scmp.ne.s32.totalorder %s76, %s79
      %p88 = scmp.eq.s32.totalorder %s21, 1
      %p89 = por %p87, %p88
      %p90 = scmp.ne.s32.totalorder %s79, %s80
      %p91 = scmp.eq.s32.totalorder %s21, 0
      %p92 = por %p90, %p91
      %p93 = scmp.ne.s32.totalorder %s79, %s80
      %p94 = scmp.eq.s32.totalorder %s22, 1
      %p95 = por %p93, %p94
      %p97 = scmp.ne.s32.totalorder %s80, %s96
      %p98 = scmp.eq.s32.totalorder %s22, 0
      %p99 = por %p97, %p98
      %s100 = ssub.s32 %s23, %s35
      %p101 = scmp.eq.s32.totalorder %s100, 0
      %s103 = sadd.s32 %s102, 1
      %s104 = scalar_select %p101, %s102, %s103
      %p107 = pneg %p101
      %p108 = scmp.eq.s32.totalorder %s16, 1
      %p109 = por %p107, %p108
      %p110 = scmp.ne.s32.totalorder %s102, %s105
      %p111 = scmp.eq.s32.totalorder %s16, 0
      %p112 = por %p110, %p111
      %p113 = scmp.ne.s32.totalorder %s102, %s105
      %p114 = scmp.eq.s32.totalorder %s21, 1
      %p115 = por %p113, %p114
      %p116 = scmp.ne.s32.totalorder %s105, %s106
      %p117 = scmp.eq.s32.totalorder %s21, 0
      %p118 = por %p116, %p117
      %p119 = scmp.ne.s32.totalorder %s105, %s106
      %p120 = scmp.eq.s32.totalorder %s22, 1
      %p121 = por %p119, %p120
      %p123 = scmp.ne.s32.totalorder %s106, %s122
      %p124 = scmp.eq.s32.totalorder %s22, 0
      %p125 = por %p123, %p124
      %s126 = ssub.s32 %s23, %s35
      %p127 = scmp.eq.s32.totalorder %s126, 0
      %s129 = sadd.s32 %s128, 1
      %s130 = scalar_select %p127, %s128, %s129
      %p133 = pneg %p127
      %p134 = scmp.eq.s32.totalorder %s16, 1
      %p135 = por %p133, %p134
      %p136 = scmp.ne.s32.totalorder %s128, %s131
      %p137 = scmp.eq.s32.totalorder %s16, 0
      %p138 = por %p136, %p137
      %p139 = scmp.ne.s32.totalorder %s128, %s131
      %p140 = scmp.eq.s32.totalorder %s21, 1
      %p141 = por %p139, %p140
      %p142 = scmp.ne.s32.totalorder %s131, %s132
      %p143 = scmp.eq.s32.totalorder %s21, 0
      %p144 = por %p142, %p143
      %p145 = scmp.ne.s32.totalorder %s131, %s132
      %p146 = scmp.eq.s32.totalorder %s22, 1
      %p147 = por %p145, %p146
      %p149 = scmp.ne.s32.totalorder %s132, %s148
      %p150 = scmp.eq.s32.totalorder %s22, 0
      %p151 = por %p149, %p150
      %p152 = scmp.le.s32.totalorder 1, %s16
      %p153 = scmp.lt.s32.totalorder %s16, 3
      %p154 = pnand %p152, %p153
      %p155 = pneg %p154
      // Predicated region
      $region9: #{tpu_custom_call.1} parent=5 // pred_check
        _
      $region10: #{tpu_custom_call.1} parent=5 // pred_check_branch
        %157 = sbr.rel (%p154) target = $region12
      $region11: #{tpu_custom_call.1} parent=5 // pred_region
        %s158 = ssub.s32 %s16, 1
      $region12: #{tpu_custom_call.1} parent=5 // pred_fallthru
        _
      %p159 = scmp.lt.s32.totalorder %s16, 2
      // Predicated region
      $region13: #{tpu_custom_call.1} parent=5 // pred_check
        %p160 = pneg %p159
      $region14: #{tpu_custom_call.1} parent=5 // pred_check_branch
        %162 = sbr.rel (%p160) target = $region16
      $region15: #{tpu_custom_call.1} parent=5 // pred_region
        // Predicated region
        $region17: #{tpu_custom_call.1} parent=15 // pred_check
          %p163 = pneg %p54
        $region18: #{tpu_custom_call.1} parent=15 // pred_check_branch
          %165 = sbr.rel (%p163) target = $region20
        $region19: #{tpu_custom_call.1} parent=15 // pred_region
          %s166 = sadd.s32 %s23, %s24
          %p167 = scmp.lt.s32.totalorder %s166, 0
          %s168 = scalar_select %p167, %s166, 0
          %p169 = scmp.lt.s32.totalorder %s168, 0
          %s170 = scalar_select %p169, %s168, 0
          %s171 = smul.addr %s170, 8
          %s172 = scalar_lea.vmem %s0, %s171
          %s173 = sadd.s32 %s23, %s24
          %p174 = scmp.lt.s32.totalorder %s173, 0
          %s175 = scalar_select %p174, %s173, 0
        $region20: #{tpu_custom_call.1} parent=15 // pred_fallthru
          _
        // Predicated region
        $region21: #{tpu_custom_call.1} parent=15 // pred_check
          %p176 = pneg %p86
        $region22: #{tpu_custom_call.1} parent=15 // pred_check_branch
          %178 = sbr.rel (%p176) target = $region24
        $region23: #{tpu_custom_call.1} parent=15 // pred_region
          %s179 = sadd.s32 %s23, %s24
          %p180 = scmp.lt.s32.totalorder %s179, 0
          %s181 = scalar_select %p180, %s179, 0
          %p182 = scmp.lt.s32.totalorder %s181, 0
          %s183 = scalar_select %p182, %s181, 0
          %s184 = smul.addr %s183, 8
          %s185 = scalar_lea.vmem %s1, %s184
          %s186 = sadd.s32 %s23, %s24
          %p187 = scmp.lt.s32.totalorder %s186, 0
          %s188 = scalar_select %p187, %s186, 0
        $region24: #{tpu_custom_call.1} parent=15 // pred_fallthru
          _
      $region16: #{tpu_custom_call.1} parent=5 // pred_fallthru
        _
      %p189 = scmp.le.s32.totalorder 1, %s16
      %p190 = scmp.lt.s32.totalorder %s16, 3
      %p191 = pnand %p189, %p190
      %p192 = pneg %p191
      // Predicated region
      $region25: #{tpu_custom_call.1} parent=5 // pred_check
        _
      $region26: #{tpu_custom_call.1} parent=5 // pred_check_branch
        %194 = sbr.rel (%p191) target = $region28
      $region27: #{tpu_custom_call.1} parent=5 // pred_region
        %s195 = ssub.s32 %s16, 1
        %s196 = sadd.s32 %s25, %s26
        %p197 = scmp.lt.s32.totalorder %s196, 0
        %s198 = scalar_select %p197, %s196, 0
        %p199 = scmp.lt.s32.totalorder %s198, 0
        %s200 = scalar_select %p199, %s198, 0
        %s201 = smul.addr %s200, 8
        %s202 = scalar_lea.vmem %s0, %s201
        %p203 = pneg %p60
        %p204 = pneg %p57
        %s205 = sadd.s32 %s25, %s26
        %p206 = scmp.lt.s32.totalorder %s205, 0
        %s207 = scalar_select %p206, %s205, 0
        %p208 = scmp.lt.s32.totalorder %s207, 0
        %s209 = scalar_select %p208, %s207, 0
        %s210 = smul.addr %s209, 8
        %s211 = scalar_lea.vmem %s1, %s210
        %p212 = pneg %p92
        %p213 = pneg %p89
        %p214 = pneg %p118
        %p215 = pneg %p115
        %s216 = sand.u32 %s105, 1
        %s217 = scalar_lea.sflag [#allocation5], %s216
        %s218 = sand.u32 %s105, 1
        %s219 = scalar_lea.vmem [#allocation4], %s218
        %p220 = pneg %p144
        %p221 = pneg %p141
        %s222 = sand.u32 %s131, 1
        %s223 = scalar_lea.sflag [#allocation7], %s222
        %s224 = sand.u32 %s131, 1
        %s225 = scalar_lea.vmem [#allocation6], %s224
        %s226 = sadd.s32 %s25, %s26
        %p227 = scmp.lt.s32.totalorder %s226, 0
        %s228 = scalar_select %p227, %s226, 0
        %p229 = scmp.lt.s32.totalorder %s228, 0
        %s230 = scalar_select %p229, %s228, 0
        %s231 = smul.addr %s230, 8
        %s232 = scalar_lea.vmem %s0, %s231
        %s233 = sadd.s32 %s25, %s26
        %p234 = scmp.lt.s32.totalorder %s233, 0
        %s235 = scalar_select %p234, %s233, 0
        %s236 = sadd.s32 %s25, %s26
        %p237 = scmp.lt.s32.totalorder %s236, 0
        %s238 = scalar_select %p237, %s236, 0
        %p239 = scmp.lt.s32.totalorder %s238, 0
        %s240 = scalar_select %p239, %s238, 0
        %s241 = smul.addr %s240, 8
        %s242 = scalar_lea.vmem %s1, %s241
        %s243 = sadd.s32 %s25, %s26
        %p244 = scmp.lt.s32.totalorder %s243, 0
        %s245 = scalar_select %p244, %s243, 0
        %p246 = scmp.eq.s32.totalorder %s26, 0
        // Predicated region
        $region29: #{tpu_custom_call.1} parent=27 // pred_check
          %p247 = pneg %p246
        $region30: #{tpu_custom_call.1} parent=27 // pred_check_branch
          %249 = sbr.rel (%p247) target = $region32
        $region31: #{tpu_custom_call.1} parent=27 // pred_region
          %vm250 = vcmask 7168
          %251 = vst.msk [vmem:[#allocation2] sm:$0xff] %vm250, 0.0
          %252 = vst.msk [vmem:[#allocation3] sm:$0xff] %vm250, 0.0
        $region32: #{tpu_custom_call.1} parent=27 // pred_fallthru
          _
        %s253 = sadd.s32 %s25, %s26
        %s254 = smul.u32 %s253, 8
        %v255 = vld [vmem:[%s232] sm:$0xff]
        %v256 = vld [vmem:[%s242] sm:$0xff]
        %vm257 = vcmask 261120
        %v258 = vsel %vm257, %v255, -inf
        %259 = vmax.xlane.f32.xlu0 %v258
        %v260 = vpop.xlane.xlu0 %259
        %v261 = vsub.f32 %v255, %v260
        %v262 = vmul.f32 %v261, 1.442695
        %v263 = vpow.pop %v262
        %v264 = vsel %vm257, %v263, 0.0
        %265 = vadd.xlane.f32.xlu0 %v264
        %v266 = vpop.xlane.xlu0 %265
        %v267 = vlog2.pop %v266
        %v268 = vmul.f32 %v267, 0.6931472
        %v269 = vlaneseq
        %v270 = vand.u32 %v269, 127
        %271 = vset.pattern.permute.xlu0 0
        %272 = vperm.xlu0 %271, %v256
        %v273 = vpop.permute.xlu0 %272
        %vm274 = vcmp.eq.s32.totalorder %v270, %v273
        %v275 = vsel %vm274, %v261, 0.0
        %v276 = vsel %vm257, %v275, 0.0
        %277 = vadd.xlane.f32.xlu0 %v276
        %v278 = vpop.xlane.xlu0 %277
        %v279 = vsub.f32 %v268, %v278
        %v280 = vadd.f32 %v279, 1.0
        %v281 = vmul.f32 %v280, %v280
        %s282 = sadd.s32 %s254, 8
        %p283 = scmp.le.s32.totalorder %s282, 8
        // Predicated region
        $region33: #{tpu_custom_call.1} parent=27 // pred_check
          %p284 = pneg %p283
        $region34: #{tpu_custom_call.1} parent=27 // pred_check_branch
          %286 = sbr.rel (%p284) target = $region36
        $region35: #{tpu_custom_call.1} parent=27 // pred_region
          %v287 = vld [vmem:[#allocation2] sm:$0xff]
          %v288 = vadd.f32 %v287, %v281
          %vm289 = vcmask 7168
          %290 = vst.msk [vmem:[#allocation2] sm:$0xff] %vm289, %v288
          %v291 = vld [vmem:[#allocation3] sm:$0xff]
          %v292 = vadd.f32 %v291, %v279
          %293 = vst.msk [vmem:[#allocation3] sm:$0xff] %vm289, %v292
        $region36: #{tpu_custom_call.1} parent=27 // pred_fallthru
          _
        %p294 = scmp.gt.s32.totalorder %s282, 8
        // Predicated region
        $region37: #{tpu_custom_call.1} parent=27 // pred_check
          %p295 = pneg %p294
        $region38: #{tpu_custom_call.1} parent=27 // pred_check_branch
          %297 = sbr.rel (%p295) target = $region40
        $region39: #{tpu_custom_call.1} parent=27 // pred_region
          %v298 = vlaneseq
          %v299 = vshrl.u32 %v298, 7
          %v300 = vstv %s254
          %v301 = vadd.s32 %v300, %v299
          %vm302 = vcmp.lt.s32.totalorder %v301, 8
          %v303 = vld [vmem:[#allocation2] sm:$0xff]
          %v304 = vsel %vm302, %v281, 0.0
          %v305 = vadd.f32 %v303, %v304
          %vm306 = vcmask 7168
          %307 = vst.msk [vmem:[#allocation2] sm:$0xff] %vm306, %v305
          %v308 = vld [vmem:[#allocation3] sm:$0xff]
          %v309 = vsel %vm302, %v279, 0.0
          %v310 = vadd.f32 %v308, %v309
          %311 = vst.msk [vmem:[#allocation3] sm:$0xff] %vm306, %v310
        $region40: #{tpu_custom_call.1} parent=27 // pred_fallthru
          _
        // Predicated region
        $region41: #{tpu_custom_call.1} parent=27 // pred_check
          %p312 = pneg %p246
        $region42: #{tpu_custom_call.1} parent=27 // pred_check_branch
          %314 = sbr.rel (%p312) target = $region44
        $region43: #{tpu_custom_call.1} parent=27 // pred_region
          %v315 = vld [vmem:[#allocation2] sm:$0xff]
          %vm316 = vcmask 7168
          %v317 = vsel %vm316, %v315, 0.0
          %318 = vadd.xlane.f32.xlu0 %v317
          %v319 = vpop.xlane.xlu0 %318
          %v320 = vrot.slane %v319, 4
          %v321 = vadd.f32 %v319, %v320
          %v322 = vrot.slane %v321, 2
          %v323 = vadd.f32 %v321, %v322
          %v324 = vrot.slane %v323, 1
          %v325 = vadd.f32 %v323, %v324
          %s326 = vtos %v325
          %v327 = vstv %s326
          %328 = vst [vmem:[%s219] sm:$0x1] %v327
          %v329 = vld [vmem:[#allocation3] sm:$0xff]
          %v330 = vsel %vm316, %v329, 0.0
          %331 = vadd.xlane.f32.xlu0 %v330
          %v332 = vpop.xlane.xlu0 %331
          %v333 = vrot.slane %v332, 4
          %v334 = vadd.f32 %v332, %v333
          %v335 = vrot.slane %v334, 2
          %v336 = vadd.f32 %v334, %v335
          %v337 = vrot.slane %v336, 1
          %v338 = vadd.f32 %v336, %v337
          %s339 = vtos %v338
          %v340 = vstv %s339
          %341 = vst [vmem:[%s225] sm:$0x1] %v340
        $region44: #{tpu_custom_call.1} parent=27 // pred_fallthru
          _
        %s342 = sand.u32 %s105, 1
        %s343 = scalar_lea.sflag [#allocation5], %s342
        %s344 = sand.u32 %s105, 1
        %s345 = scalar_lea.vmem [#allocation4], %s344
        %s346 = sand.u32 %s131, 1
        %s347 = scalar_lea.sflag [#allocation7], %s346
        %s348 = sand.u32 %s131, 1
        %s349 = scalar_lea.vmem [#allocation6], %s348
        // Predicated region
        $region45: #{tpu_custom_call.1} parent=27 // pred_check
          %p350 = pneg %p115
        $region46: #{tpu_custom_call.1} parent=27 // pred_check_branch
          %352 = sbr.rel (%p350) target = $region48
        $region47: #{tpu_custom_call.1} parent=27 // pred_region
          %354 = vsyncadd %s343, 0
          %s355 = scalar_lea.hbm %s2, %s25
          %s357 = sshll.u32 %s345, 4
          %s358 = int_to_ptr.vmem [resolvable:$true] %s357
          %s359 = sshll.u32 %s355, 4
          %s360 = int_to_ptr.hbm [resolvable:$true] %s359
          %362 = dma.vmem_to_hbm [thread:$0]  %s358, 16, %s360, %s343
        $region48: #{tpu_custom_call.1} parent=27 // pred_fallthru
          _
        // Predicated region
        $region49: #{tpu_custom_call.1} parent=27 // pred_check
          %p363 = pneg %p141
        $region50: #{tpu_custom_call.1} parent=27 // pred_check_branch
          %365 = sbr.rel (%p363) target = $region52
        $region51: #{tpu_custom_call.1} parent=27 // pred_region
          %367 = vsyncadd %s347, 0
          %s368 = scalar_lea.hbm %s3, %s25
          %s370 = sshll.u32 %s349, 4
          %s371 = int_to_ptr.vmem [resolvable:$true] %s370
          %s372 = sshll.u32 %s368, 4
          %s373 = int_to_ptr.hbm [resolvable:$true] %s372
          %375 = dma.vmem_to_hbm [thread:$0]  %s371, 16, %s373, %s347
        $region52: #{tpu_custom_call.1} parent=27 // pred_fallthru
          _
      $region28: #{tpu_custom_call.1} parent=5 // pred_fallthru
        _
      %p376 = scmp.le.s32.totalorder 2, %s16
      // Predicated region
      $region53: #{tpu_custom_call.1} parent=5 // pred_check
        %p377 = pneg %p376
      $region54: #{tpu_custom_call.1} parent=5 // pred_check_branch
        %379 = sbr.rel (%p377) target = $region56
      $region55: #{tpu_custom_call.1} parent=5 // pred_region
        %s380 = ssub.s32 %s16, 2
        // Predicated region
        $region57: #{tpu_custom_call.1} parent=55 // pred_check
          %p381 = pneg %p121
        $region58: #{tpu_custom_call.1} parent=55 // pred_check_branch
          %383 = sbr.rel (%p381) target = $region60
        $region59: #{tpu_custom_call.1} parent=55 // pred_region
          %s384 = sand.u32 %s106, 1
          %s385 = scalar_lea.sflag [#allocation5], %s384
          %s386 = sand.u32 %s106, 1
          %s387 = scalar_lea.vmem [#allocation4], %s386
          %389 = dma.done %s385, 16
        $region60: #{tpu_custom_call.1} parent=55 // pred_fallthru
          _
        // Predicated region
        $region61: #{tpu_custom_call.1} parent=55 // pred_check
          %p390 = pneg %p147
        $region62: #{tpu_custom_call.1} parent=55 // pred_check_branch
          %392 = sbr.rel (%p390) target = $region64
        $region63: #{tpu_custom_call.1} parent=55 // pred_region
          %s393 = sand.u32 %s132, 1
          %s394 = scalar_lea.sflag [#allocation7], %s393
          %s395 = sand.u32 %s132, 1
          %s396 = scalar_lea.vmem [#allocation6], %s395
          %398 = dma.done %s394, 16
        $region64: #{tpu_custom_call.1} parent=55 // pred_fallthru
          _
      $region56: #{tpu_custom_call.1} parent=5 // pred_fallthru
        _
    $region6: #{tpu_custom_call.1} parent=1 // loop_footer
      %s20 = sadd.s32 1, %s16
    $region7: #{tpu_custom_call.1} parent=1 // loop_footer_branch
      %15 = sbr.rel target = $region3
    $region8: #{tpu_custom_call.1} parent=1 // loop_exit
      _
    %399 = vsyncpa [#allocation5], 1
    %s400 = scalar_lea.sflag [#allocation5], 1
    %401 = vsyncpa %s400, 1
    %402 = vsyncpa [#allocation7], 1
    %s403 = scalar_lea.sflag [#allocation7], 1
    %404 = vsyncpa %s403, 1

</llo_original>
